<compile_context>
chip_gen: v6e
topology: v6e:2x2x1
jax: 0.10.0
libtpu: 0.0.40
codegen_flags: <defaults>
</compile_context>

<pallas_src>
import math
import functools

import jax
import jax.numpy as jnp
from jax.experimental import pallas as pl
from jax.experimental.pallas import tpu as pltpu


def _build_pe(max_seq_len: int, embed_size: int) -> jnp.ndarray:
    """Reproduce the PyTorch double loop exactly:
         for i in range(0, E, 2):
             pe[pos, i]   = sin(pos / 10000 ** (2 * i / E))
             pe[pos, i+1] = cos(pos / 10000 ** (2 * i / E))
    The exponent uses the literal column index i (which steps by 2), so this
    intentionally matches the source module, not the "standard" Vaswani
    formula. Requires even embed_size (same implicit assumption as the source).
    """
    assert embed_size % 2 == 0, "embed_size must be even (as in the source module)"
    pos = jnp.arange(max_seq_len, dtype=jnp.float32)[:, None]          # (S, 1)
    i = jnp.arange(0, embed_size, 2, dtype=jnp.float32)[None, :]       # (1, E/2)
    angle = pos / jnp.power(10000.0, 2.0 * i / embed_size)             # (S, E/2)
    pe = jnp.zeros((max_seq_len, embed_size), dtype=jnp.float32)
    pe = pe.at[:, 0::2].set(jnp.sin(angle))
    pe = pe.at[:, 1::2].set(jnp.cos(angle))
    return pe[None, :, :]                                              # (1, S, E)


def _pe_kernel(x_ref, pe_ref, o_ref, *, scale: float):
    # Elementwise hot path: scale * x + pe.  pe broadcasts over the leading
    # (batch) rows of the block when its block shape has a leading 1.
    o_ref[...] = scale * x_ref[...] + pe_ref[...]


# ~2 MiB of f32 per x tile.  With x/out/pe double-buffered this keeps the total
# resident VMEM around 8-12 MiB -- comfortably under v7x's 32 MiB scoped
# default (and trivially under v6e/v5e limits) without touching vmem_limit.
_TARGET_TILE_ELEMS = 512 * 1024


def _positional_encoder_lane_dense_3d(x, pe, scale):
    """Path for E a multiple of 128: the natural layout is already lane-dense."""
    B, S, E = x.shape
    kernel = functools.partial(_pe_kernel, scale=scale)

    if S * E <= _TARGET_TILE_ELEMS:
        # Small per-batch slab: group whole batches per block so each DMA is as
        # large as possible.  pe (1, S, E) broadcasts over tile_b in-kernel.
        tile_b = max(1, min(B, _TARGET_TILE_ELEMS // (S * E)))
        return pl.pallas_call(
            kernel,
            out_shape=jax.ShapeDtypeStruct((B, S, E), x.dtype),
            grid=(pl.cdiv(B, tile_b),),
            in_specs=[
                pl.BlockSpec((tile_b, S, E), lambda b: (b, 0, 0)),   # x
                pl.BlockSpec((1, S, E), lambda b: (0, 0, 0)),        # pe
            ],
            out_specs=pl.BlockSpec((tile_b, S, E), lambda b: (b, 0, 0)),
            compiler_params=pltpu.CompilerParams(
                dimension_semantics=("parallel",),
            ),
        )(x, pe)

    # Large S*E: tile the seq axis (~2 MiB per x tile), batch innermost so the
    # pe block index only changes when the seq tile changes (one pe DMA per
    # seq tile instead of per grid step).
    tile_s = max(8, (min(S, _TARGET_TILE_ELEMS // E) // 8) * 8)
    return pl.pallas_call(
        kernel,
        out_shape=jax.ShapeDtypeStruct((B, S, E), x.dtype),
        grid=(pl.cdiv(S, tile_s), B),
        in_specs=[
            pl.BlockSpec((1, tile_s, E), lambda s, b: (b, s, 0)),    # x
            pl.BlockSpec((1, tile_s, E), lambda s, b: (0, s, 0)),    # pe
        ],
        out_specs=pl.BlockSpec((1, tile_s, E), lambda s, b: (b, s, 0)),
        compiler_params=pltpu.CompilerParams(
            dimension_semantics=("parallel", "parallel"),
        ),
    )(x, pe)


def _positional_encoder_flat(x, pe, scale):
    """Path for lane-narrow E (e.g. E=32): flatten (S, E) into one lane-dense
    column axis so stores are full-width vst instead of masked vst.msk."""
    B, S, E = x.shape
    C = S * E
    xf = x.reshape(B, C)            # contiguous collapse: free on the wrapper side
    pef = pe.reshape(1, C)

    if C % 128 == 0:
        tile_c = min(C, 2048)       # lane-dense column tile
    else:
        tile_c = C                  # full extent; fine for small models
        # TODO(synk): pad the flattened axis to a multiple of 128 for large, unaligned S*E.

    if B >= 8:
        rows_for_budget = max(8, ((_TARGET_TILE_ELEMS // tile_c) // 8) * 8)
        tile_b = min((B // 8) * 8, rows_for_budget)
    else:
        tile_b = B                  # full extent (always legal)

    kernel = functools.partial(_pe_kernel, scale=scale)
    out = pl.pallas_call(
        kernel,
        out_shape=jax.ShapeDtypeStruct((B, C), x.dtype),
        # column tiles outer, row (batch) tiles inner: pe is fetched once per
        # column tile instead of once per grid step.
        grid=(pl.cdiv(C, tile_c), pl.cdiv(B, tile_b)),
        in_specs=[
            pl.BlockSpec((tile_b, tile_c), lambda c, r: (r, c)),     # x
            pl.BlockSpec((1, tile_c), lambda c, r: (0, c)),          # pe
        ],
        out_specs=pl.BlockSpec((tile_b, tile_c), lambda c, r: (r, c)),
        compiler_params=pltpu.CompilerParams(
            dimension_semantics=("parallel", "parallel"),
        ),
    )(xf, pef)
    return out.reshape(B, S, E)


def positional_encoder(x: jnp.ndarray, pe: jnp.ndarray, d_model: int) -> jnp.ndarray:
    """x: (B, S, E) float32, pe: (1, S, E) float32 -> (B, S, E) float32."""
    B, S, E = x.shape
    assert pe.shape == (1, S, E), "pe must be (1, max_seq_len, embed_size)"
    assert d_model == E, "d_model must equal the embedding dim of x"
    scale = math.sqrt(d_model)
    if E % 128 == 0:
        return _positional_encoder_lane_dense_3d(x, pe, scale)
    return _positional_encoder_flat(x, pe, scale)


if __name__ == "__main__":
    # Small config consistent with the module: max_seq_len=8, embed_size=32.
    batch, max_seq_len, embed_size = 2, 8, 32

    key = jax.random.PRNGKey(0)
    x = jax.random.normal(key, (batch, max_seq_len, embed_size), dtype=jnp.float32)
    pe = _build_pe(max_seq_len, embed_size)

    out = positional_encoder(x, pe, d_model=embed_size)
    out = jax.block_until_ready(out)

    ref = math.sqrt(embed_size) * x + pe
    assert out.shape == (batch, max_seq_len, embed_size)
    assert jnp.allclose(out, ref, atol=1e-5, rtol=1e-5)

    # Exercise the batch-grouped lane-dense 3D path (E multiple of 128, small S*E).
    b2, s2, e2 = 4, 16, 128
    x2 = jax.random.normal(jax.random.PRNGKey(0), (b2, s2, e2), dtype=jnp.float32)
    pe2 = _build_pe(s2, e2)
    out2 = jax.block_until_ready(positional_encoder(x2, pe2, d_model=e2))
    ref2 = math.sqrt(e2) * x2 + pe2
    assert jnp.allclose(out2, ref2, atol=1e-5, rtol=1e-5)

    # Exercise the seq-tiled lane-dense 3D path (S*E above the per-tile budget).
    b3, s3, e3 = 2, 8192, 128
    x3 = jax.random.normal(jax.random.PRNGKey(0), (b3, s3, e3), dtype=jnp.float32)
    pe3 = _build_pe(s3, e3)
    out3 = jax.block_until_ready(positional_encoder(x3, pe3, d_model=e3))
    ref3 = math.sqrt(e3) * x3 + pe3
    assert jnp.allclose(out3, ref3, atol=1e-5, rtol=1e-5)

    print("KERNEL_OK")
</pallas_src>

<mosaic_0001>
module attributes {stable_mosaic.version = 11 : i64} {
  func.func @_pe_kernel(%arg0: i32, %arg1: i32, %arg2: memref<2x256xf32, #tpu.memory_space<vmem>>, %arg3: memref<1x256xf32, #tpu.memory_space<vmem>>, %arg4: memref<2x256xf32, #tpu.memory_space<vmem>>) attributes {dimension_semantics = [#tpu.dimension_semantics<parallel>, #tpu.dimension_semantics<parallel>], iteration_bounds = array<i64: 1, 1>, scalar_prefetch = 0 : i64, scratch_operands = 0 : i64, tpu.core_type = #tpu.core_type<tc>, window_params = [{transform_indices = @transform_0, window_bounds = array<i64: 2, 256>}, {transform_indices = @transform_1, window_bounds = array<i64: 1, 256>}, {transform_indices = @transform_2, window_bounds = array<i64: 2, 256>}]} {
    %c0 = arith.constant 0 : index
    %c0_0 = arith.constant 0 : index
    %0 = vector.load %arg2[%c0, %c0_0] : memref<2x256xf32, #tpu.memory_space<vmem>>, vector<2x256xf32>
    %cst = arith.constant 5.65685415 : f32
    %1 = vector.broadcast %cst : f32 to vector<2x256xf32>
    %2 = arith.mulf %1, %0 : vector<2x256xf32>
    %c0_1 = arith.constant 0 : index
    %c0_2 = arith.constant 0 : index
    %3 = vector.load %arg3[%c0_1, %c0_2] : memref<1x256xf32, #tpu.memory_space<vmem>>, vector<1x256xf32>
    %4 = vector.broadcast %3 : vector<1x256xf32> to vector<2x256xf32>
    %5 = arith.addf %2, %4 : vector<2x256xf32>
    %c0_3 = arith.constant 0 : index
    %c0_4 = arith.constant 0 : index
    %6 = vector.load %arg4[%c0_3, %c0_4] : memref<2x256xf32, #tpu.memory_space<vmem>>, vector<2x256xf32>
    tpu.vector_store %arg4[%c0_3, %c0_4], %5 {strides = array<i32>} : memref<2x256xf32, #tpu.memory_space<vmem>>, vector<2x256xf32>,
    return
  }
  func.func @transform_0(%arg0: i32, %arg1: i32) -> (i32, i32) {
    %c0_i32 = arith.constant 0 : i32
    return %arg1, %arg0 : i32, i32
  }
  func.func @transform_1(%arg0: i32, %arg1: i32) -> (i32, i32) {
    %c0_i32 = arith.constant 0 : i32
    %c0_i32_0 = arith.constant 0 : i32
    return %c0_i32, %arg0 : i32, i32
  }
  func.func @transform_2(%arg0: i32, %arg1: i32) -> (i32, i32) {
    %c0_i32 = arith.constant 0 : i32
    return %arg1, %arg0 : i32, i32
  }
}

</mosaic_0001>

<llo_original>
// kernel: tpu_custom_call.1
$region0: #{tpu_custom_call.1}
  #allocation0 [shape = 'u32[]', space=smem, size = 0x4, offset = 0x4, fixed_abs, tag = 'smem constant byte address 0x4 - core index']
  #allocation1 [shape = 'u32[144,128]{1,0:T(1,128)}', space=vmem, size = 0x12000, scoped, tag = 'internal scratch']
  %s0 = inlined_call_operand.hbm [shape: f32[2,256], index: 0, kind: input, shape index: {}]
  %s1 = inlined_call_operand.hbm [shape: f32[1,256], index: 1, kind: input, shape index: {}]
  %s2 = inlined_call_operand.hbm [shape: f32[2,256], index: 2, kind: output, shape index: {}]
  %s3 = sld [smem:[#allocation0]]
  $region26: #{tpu_custom_call.1} parent=0
    _
  %s5 = ssub.s32 1, %s3
  %s6 = scalar_select 0, %s5, %s3
  $region1: #{tpu_custom_call.1} parent=0
    #allocation2 [shape = 'u8[2048]{0}', space=vmem, size = 0x800, scoped, tag = 'input window, operand 0, single buffered']
    #allocation3 [shape = 's32[1]{0}', space=sflag, size = 0x4, scoped, tag = 'scoped memory for tpu_custom_call.1']
    #allocation4 [shape = 's32[1]{0}', space=sflag, size = 0x4, scoped, tag = 'scoped memory for tpu_custom_call.1']
    #allocation5 [shape = 'u8[1024]{0}', space=vmem, size = 0x400, scoped, tag = 'input window, operand 1, single buffered']
    #allocation6 [shape = 's32[1]{0}', space=sflag, size = 0x4, scoped, tag = 'scoped memory for tpu_custom_call.1']
    #allocation7 [shape = 'u8[2048]{0}', space=vmem, size = 0x800, scoped, tag = 'output window, operand 0, single buffered']
    %7 = vsyncpa [#allocation3], 0
    %8 = vsyncpa [#allocation6], 0
    %9 = vsyncpa [#allocation4], 0
    // Predicated region
    $region2: #{tpu_custom_call.1} parent=1 // pred_check
      _
    $region3: #{tpu_custom_call.1} parent=1 // pred_check_branch
      %11 = sbr.rel (0) target = $region5
    $region4: #{tpu_custom_call.1} parent=1 // pred_region
      %s13 = ssub.s32 64, 64
      %14 = vsyncadd [#allocation3], %s13
      %s16 = sshll.u32 [#allocation2], 4
      %s17 = int_to_ptr.vmem [resolvable:$true] %s16
      %19 = dma.hbm_to_vmem [thread:$0]  %s0, 64, %s17, [#allocation3]
    $region5: #{tpu_custom_call.1} parent=1 // pred_fallthru
      _
    // Predicated region
    $region6: #{tpu_custom_call.1} parent=1 // pred_check
      _
    $region7: #{tpu_custom_call.1} parent=1 // pred_check_branch
      %21 = sbr.rel (0) target = $region9
    $region8: #{tpu_custom_call.1} parent=1 // pred_region
      %s23 = ssub.s32 32, 32
      %24 = vsyncadd [#allocation6], %s23
      %s26 = sshll.u32 [#allocation5], 4
      %s27 = int_to_ptr.vmem [resolvable:$true] %s26
      %29 = dma.hbm_to_vmem [thread:$0]  %s1, 32, %s27, [#allocation6]
    $region9: #{tpu_custom_call.1} parent=1 // pred_fallthru
      _
    // Predicated region
    $region10: #{tpu_custom_call.1} parent=1 // pred_check
      _
    $region11: #{tpu_custom_call.1} parent=1 // pred_check_branch
      %31 = sbr.rel (0) target = $region13
    $region12: #{tpu_custom_call.1} parent=1 // pred_region
      %32 = dma.done [#allocation3], 64
    $region13: #{tpu_custom_call.1} parent=1 // pred_fallthru
      _
    // Predicated region
    $region14: #{tpu_custom_call.1} parent=1 // pred_check
      _
    $region15: #{tpu_custom_call.1} parent=1 // pred_check_branch
      %34 = sbr.rel (0) target = $region17
    $region16: #{tpu_custom_call.1} parent=1 // pred_region
      %35 = dma.done [#allocation6], 32
    $region17: #{tpu_custom_call.1} parent=1 // pred_fallthru
      _
    %v36 = vld [vmem:[#allocation2] sm:$0xf]
    %v37 = vmul.f32 %v36, 5.656854
    %v38 = vld [vmem:[#allocation5] sm:$0x3]
    %v40 = vlaneseq
    %v41 = vshrl.u32 %v40, 7
    %v42 = vsub.s32 0, %v41
    %v43 = vrot.slane %v38, %v42
    %v44 = vlaneseq
    %v45 = vshrl.u32 %v44, 7
    %v46 = vsub.s32 1, %v45
    %v47 = vrot.slane %v38, %v46
    %v48 = vcombine.low %v43, %v47
    %v50 = vunpack.c.l.s4 1983009808
    %v51 = vunpack.c.0.s8 %v50
    %v52 = vlaneseq
    %v53 = vshrl.u32 %v52, 7
    %v54 = vsub.s32 %v51, %v53
    %v55 = vrot.slane %v48, %v54
    %v57 = vadd.f32 %v37, %v55
    %58 = vst [vmem:[#allocation7] sm:$0xf] %v57
    // Predicated region
    $region18: #{tpu_custom_call.1} parent=1 // pred_check
      _
    $region19: #{tpu_custom_call.1} parent=1 // pred_check_branch
      %60 = sbr.rel (0) target = $region21
    $region20: #{tpu_custom_call.1} parent=1 // pred_region
      %s62 = ssub.s32 64, 64
      %63 = vsyncadd [#allocation4], %s62
      %s65 = sshll.u32 [#allocation7], 4
      %s66 = int_to_ptr.vmem [resolvable:$true] %s65
      %68 = dma.vmem_to_hbm [thread:$0]  %s66, 64, %s2, [#allocation4]
    $region21: #{tpu_custom_call.1} parent=1 // pred_fallthru
      _
    // Predicated region
    $region22: #{tpu_custom_call.1} parent=1 // pred_check
      _
    $region23: #{tpu_custom_call.1} parent=1 // pred_check_branch
      %70 = sbr.rel (0) target = $region25
    $region24: #{tpu_custom_call.1} parent=1 // pred_region
      %71 = dma.done [#allocation4], 64
    $region25: #{tpu_custom_call.1} parent=1 // pred_fallthru
      _
    %72 = vsyncpa [#allocation3], 1
    %73 = vsyncpa [#allocation6], 1
    %74 = vsyncpa [#allocation4], 1

</llo_original>
